<compile_context>
chip_gen: v6e
topology: v6e:2x2x1
jax: 0.10.0
libtpu: 0.0.40
codegen_flags: <defaults>
</compile_context>

<pallas_src>
import functools

import jax
import jax.numpy as jnp
import numpy as np
from jax.experimental import pallas as pl
from jax.experimental.pallas import tpu as pltpu


# ---------------------------------------------------------------------------
# Pallas kernels: tiled matmul, bias folded into acc init,
#                 [+ bf16 residual | + fused downsample matmul] [+ ReLU]
#   grid = (M//tm, N//tn, K//tk), K is the reduction axis (last, "arbitrary")
# ---------------------------------------------------------------------------
def _mm_bias_kernel(relu, a_ref, w_ref, b_ref, o_ref, acc_ref):
    k = pl.program_id(2)

    @pl.when(k == 0)
    def _():
        # Bias folded into the accumulator init (once per output tile).
        acc_ref[...] = jnp.broadcast_to(b_ref[...], acc_ref.shape)

    acc_ref[...] += jnp.dot(a_ref[...], w_ref[...], preferred_element_type=jnp.float32)

    @pl.when(k == pl.num_programs(2) - 1)
    def _():
        y = acc_ref[...]
        if relu:
            y = jnp.maximum(y, 0.0)
        o_ref[...] = y.astype(o_ref.dtype)


def _mm_bias_res_kernel(relu, a_ref, w_ref, b_ref, r_ref, o_ref, acc_ref):
    # Identity-shortcut variant: bf16 residual tile added (as f32) in the epilogue.
    k = pl.program_id(2)

    @pl.when(k == 0)
    def _():
        acc_ref[...] = jnp.broadcast_to(b_ref[...], acc_ref.shape)

    acc_ref[...] += jnp.dot(a_ref[...], w_ref[...], preferred_element_type=jnp.float32)

    @pl.when(k == pl.num_programs(2) - 1)
    def _():
        y = acc_ref[...] + r_ref[...].astype(jnp.float32)
        if relu:
            y = jnp.maximum(y, 0.0)
        o_ref[...] = y.astype(o_ref.dtype)


def _mm_bias_ds_kernel(relu, a_ref, w_ref, b_ref, ra_ref, wd_ref, o_ref, acc_ref):
    # Downsample (conv1x1 + BN) fused: accumulator is *initialized* with
    # bias + downsample matmul at k == 0 (downsample BN bias pre-folded into b_ref).
    k = pl.program_id(2)

    @pl.when(k == 0)
    def _():
        acc_ref[...] = jnp.broadcast_to(b_ref[...], acc_ref.shape) + jnp.dot(
            ra_ref[...], wd_ref[...], preferred_element_type=jnp.float32
        )

    acc_ref[...] += jnp.dot(a_ref[...], w_ref[...], preferred_element_type=jnp.float32)

    @pl.when(k == pl.num_programs(2) - 1)
    def _():
        y = acc_ref[...]
        if relu:
            y = jnp.maximum(y, 0.0)
        o_ref[...] = y.astype(o_ref.dtype)


# ---------------------------------------------------------------------------
# Wrapper: padding, tiling and pallas_call
# ---------------------------------------------------------------------------
def _round_up(x, m):
    return ((x + m - 1) // m) * m


def _pad2(x, rows, cols):
    r, c = x.shape
    if r == rows and c == cols:
        return x
    return jnp.pad(x, ((0, rows - r), (0, cols - c)))


def fused_conv_matmul(
    a,
    w,
    bias,
    *,
    residual=None,
    ds=None,
    relu=False,
    out_dtype=jnp.float32,
    tm=512,
    tn=256,
    tk=512,
):
    """out = [relu]( a @ w + bias [+ residual | + ra @ wd] ).

    a: (M, K), w: (K, N) with BN scale already folded in, bias: (N,).
    ds = (ra: (M, Kd), wd: (Kd, N)) fuses the 1x1-downsample matmul into the
    same kernel (computed at the first K step). MXU operands are bf16,
    accumulation and epilogue are f32.
    """
    M, K = a.shape
    N = w.shape[1]

    # Tile sizes: 128-multiples (MXU / lane width), clipped to the problem.
    tm = min(tm, _round_up(M, 128))
    tn = min(tn, _round_up(N, 128))
    tk = min(tk, _round_up(K, 128))
    Mp, Kp, Np = _round_up(M, tm), _round_up(K, tk), _round_up(N, tn)

    a_p = _pad2(a.astype(jnp.bfloat16), Mp, Kp)
    w_p = _pad2(w.astype(jnp.bfloat16), Kp, Np)
    b_p = _pad2(bias.reshape(1, N).astype(jnp.float32), 1, Np)

    in_arrays = [a_p, w_p, b_p]
    in_specs = [
        pl.BlockSpec((tm, tk), lambda i, j, k: (i, k)),
        pl.BlockSpec((tk, tn), lambda i, j, k: (k, j)),
        pl.BlockSpec((1, tn), lambda i, j, k: (0, j)),
    ]

    if ds is not None:
        ra, wd = ds
        Kd = ra.shape[1]
        Kdp = _round_up(Kd, 128)
        ra_p = _pad2(ra.astype(jnp.bfloat16), Mp, Kdp)
        wd_p = _pad2(wd.astype(jnp.bfloat16), Kdp, Np)
        in_arrays += [ra_p, wd_p]
        # Block index is constant over k -> tile stays resident across the reduction.
        in_specs += [
            pl.BlockSpec((tm, Kdp), lambda i, j, k: (i, 0)),
            pl.BlockSpec((Kdp, tn), lambda i, j, k: (0, j)),
        ]
        kernel = functools.partial(_mm_bias_ds_kernel, relu)
    elif residual is not None:
        # Keep the residual in bf16 in HBM; upcast to f32 inside the epilogue.
        r_p = _pad2(residual.astype(jnp.bfloat16), Mp, Np)
        in_arrays.append(r_p)
        in_specs.append(pl.BlockSpec((tm, tn), lambda i, j, k: (i, j)))
        kernel = functools.partial(_mm_bias_res_kernel, relu)
    else:
        kernel = functools.partial(_mm_bias_kernel, relu)

    out = pl.pallas_call(
        kernel,
        out_shape=jax.ShapeDtypeStruct((Mp, Np), out_dtype),
        grid=(Mp // tm, Np // tn, Kp // tk),
        in_specs=in_specs,
        out_specs=pl.BlockSpec((tm, tn), lambda i, j, k: (i, j)),
        scratch_shapes=[pltpu.VMEM((tm, tn), jnp.float32)],
        compiler_params=pltpu.CompilerParams(
            dimension_semantics=("parallel", "parallel", "arbitrary"),
            vmem_limit_bytes=32 * 1024 * 1024,  # safe on v5e/v6e/v7x; tiles fit easily
        ),
    )(*in_arrays)

    return out[:M, :N]


# ---------------------------------------------------------------------------
# Glue: im2col, BN folding, weight reshape (plain JAX, runs in the jit wrapper)
# ---------------------------------------------------------------------------
def im2col(x_nhwc, kh, kw, stride, padding):
    N, H, W, C = x_nhwc.shape
    xp = jnp.pad(x_nhwc, ((0, 0), (padding, padding), (padding, padding), (0, 0)))
    Ho = (H + 2 * padding - kh) // stride + 1
    Wo = (W + 2 * padding - kw) // stride + 1
    cols = []
    for i in range(kh):
        for j in range(kw):
            cols.append(
                xp[:, i : i + stride * Ho : stride, j : j + stride * Wo : stride, :]
            )
    patches = jnp.concatenate(cols, axis=-1)  # (N, Ho, Wo, kh*kw*C)
    return patches.reshape(N * Ho * Wo, kh * kw * C), (N, Ho, Wo)


def fold_bn(bn, eps=1e-5):
    gamma, beta, mean, var = bn
    scale = gamma / jnp.sqrt(var + eps)
    bias = beta - mean * scale
    return scale, bias


def fold_scale_into_weight(w_oihw, scale):
    # (O, I, kH, kW) * scale[O]  ->  im2col layout (kH*kW*I, O)
    w = w_oihw * scale[:, None, None, None]
    O = w.shape[0]
    return jnp.transpose(w, (2, 3, 1, 0)).reshape(-1, O)


# ---------------------------------------------------------------------------
# BasicBlock forward (Pallas-backed)
# ---------------------------------------------------------------------------
def basic_block_forward(x_nchw, params, stride):
    in_ch = x_nchw.shape[1]
    out_ch = params["w1"].shape[0]
    has_downsample = (in_ch != out_ch) or (stride != 1)

    # NHWC + bf16 activations for the whole block (single transpose in/out).
    x = jnp.transpose(x_nchw, (0, 2, 3, 1)).astype(jnp.bfloat16)

    # conv1 (3x3, stride, pad=1) + BN1 + ReLU
    s1, b1 = fold_bn(params["bn1"])
    w1 = fold_scale_into_weight(params["w1"], s1)
    a1, (N, Ho, Wo) = im2col(x, 3, 3, stride, 1)
    y1 = fused_conv_matmul(a1, w1, b1, relu=True, out_dtype=jnp.bfloat16)
    y1_nhwc = y1.reshape(N, Ho, Wo, out_ch)

    # conv2 (3x3, stride=1, pad=1) + BN2 + residual + ReLU, all in one kernel.
    s2, b2 = fold_bn(params["bn2"])
    w2 = fold_scale_into_weight(params["w2"], s2)
    a2, _ = im2col(y1_nhwc, 3, 3, 1, 1)

    if has_downsample:
        # downsample conv1x1(stride) + BNd fused into the conv2 kernel:
        # its "im2col" is a strided spatial slice; its BN bias folds into b2.
        sd, bd = fold_bn(params["bnd"])
        wd = fold_scale_into_weight(params["wd"], sd)
        ad = x[:, ::stride, ::stride, :].reshape(N * Ho * Wo, in_ch)
        y = fused_conv_matmul(
            a2, w2, b2 + bd, ds=(ad, wd), relu=True, out_dtype=jnp.float32
        )
    else:
        res = x.reshape(N * Ho * Wo, out_ch)
        y = fused_conv_matmul(
            a2, w2, b2, residual=res, relu=True, out_dtype=jnp.float32
        )

    y_nhwc = y.reshape(N, Ho, Wo, out_ch)
    return jnp.transpose(y_nhwc, (0, 3, 1, 2))  # back to NCHW


# ---------------------------------------------------------------------------
# Pure-JAX f32 reference (for correctness check)
# ---------------------------------------------------------------------------
def conv2d_ref(x_nchw, w_oihw, stride, padding):
    return jax.lax.conv_general_dilated(
        x_nchw,
        w_oihw,
        (stride, stride),
        ((padding, padding), (padding, padding)),
        dimension_numbers=("NCHW", "OIHW", "NCHW"),
    )


def bn_ref(x_nchw, bn, eps=1e-5):
    gamma, beta, mean, var = bn
    scale = (gamma / jnp.sqrt(var + eps)).reshape(1, -1, 1, 1)
    bias = (beta - mean * gamma / jnp.sqrt(var + eps)).reshape(1, -1, 1, 1)
    return x_nchw * scale + bias


def basic_block_ref(x_nchw, params, stride):
    in_ch = x_nchw.shape[1]
    out_ch = params["w1"].shape[0]
    y1 = jnp.maximum(
        bn_ref(conv2d_ref(x_nchw, params["w1"], stride, 1), params["bn1"]), 0.0
    )
    y2 = bn_ref(conv2d_ref(y1, params["w2"], 1, 1), params["bn2"])
    if (in_ch != out_ch) or (stride != 1):
        res = bn_ref(conv2d_ref(x_nchw, params["wd"], stride, 0), params["bnd"])
    else:
        res = x_nchw
    return jnp.maximum(y2 + res, 0.0)


# ---------------------------------------------------------------------------
def make_params(key, in_ch, out_ch):
    ks = jax.random.split(key, 15)

    def bn_params(k0, k1, k2, k3, c):
        gamma = 1.0 + 0.1 * jax.random.normal(k0, (c,), jnp.float32)
        beta = 0.1 * jax.random.normal(k1, (c,), jnp.float32)
        mean = 0.1 * jax.random.normal(k2, (c,), jnp.float32)
        var = jnp.abs(0.1 * jax.random.normal(k3, (c,), jnp.float32)) + 0.9
        return (gamma, beta, mean, var)

    return {
        "w1": 0.1 * jax.random.normal(ks[0], (out_ch, in_ch, 3, 3), jnp.float32),
        "bn1": bn_params(ks[1], ks[2], ks[3], ks[4], out_ch),
        "w2": 0.1 * jax.random.normal(ks[5], (out_ch, out_ch, 3, 3), jnp.float32),
        "bn2": bn_params(ks[6], ks[7], ks[8], ks[9], out_ch),
        "wd": 0.1 * jax.random.normal(ks[10], (out_ch, in_ch, 1, 1), jnp.float32),
        "bnd": bn_params(ks[11], ks[12], ks[13], ks[14], out_ch),
    }


if __name__ == "__main__":
    key = jax.random.PRNGKey(0)
    kx, kp = jax.random.split(key)

    N, C_in, H, W = 2, 4, 16, 16
    C_out, stride = 8, 2

    x = jax.random.normal(kx, (N, C_in, H, W), jnp.float32)
    params = make_params(kp, C_in, C_out)

    fwd = jax.jit(basic_block_forward, static_argnums=2)
    out = jax.block_until_ready(fwd(x, params, stride))
    ref = jax.block_until_ready(basic_block_ref(x, params, stride))

    assert out.shape == (N, C_out, H // stride, W // stride), out.shape
    # bf16 MXU operands (f32 accumulation) -> looser tolerance vs. the pure-f32 reference.
    np.testing.assert_allclose(np.asarray(out), np.asarray(ref), rtol=5e-2, atol=5e-2)

    # Also check the identity-shortcut (no downsample) path: stride=1, C_in == C_out.
    params_id = make_params(kp, C_out, C_out)
    x_id = jax.random.normal(kx, (N, C_out, H, W), jnp.float32)
    out_id = jax.block_until_ready(fwd(x_id, params_id, 1))
    ref_id = jax.block_until_ready(basic_block_ref(x_id, params_id, 1))
    np.testing.assert_allclose(
        np.asarray(out_id), np.asarray(ref_id), rtol=5e-2, atol=5e-2
    )

    print("KERNEL_OK")
</pallas_src>

<mosaic_0001>
module attributes {stable_mosaic.version = 11 : i64} {
  func.func @_mm_bias_kernel(%arg0: i32, %arg1: i32, %arg2: i32, %arg3: memref<128x128xbf16, #tpu.memory_space<vmem>>, %arg4: memref<128x128xbf16, #tpu.memory_space<vmem>>, %arg5: memref<1x128xf32, #tpu.memory_space<vmem>>, %arg6: memref<128x128xbf16, #tpu.memory_space<vmem>>, %arg7: memref<128x128xf32, #tpu.memory_space<vmem>>) attributes {dimension_semantics = [#tpu.dimension_semantics<parallel>, #tpu.dimension_semantics<parallel>, #tpu.dimension_semantics<arbitrary>], iteration_bounds = array<i64: 1, 1, 1>, scalar_prefetch = 0 : i64, scratch_operands = 1 : i64, tpu.core_type = #tpu.core_type<tc>, window_params = [{transform_indices = @transform_0, window_bounds = array<i64: 128, 128>}, {transform_indices = @transform_1, window_bounds = array<i64: 128, 128>}, {transform_indices = @transform_2, window_bounds = array<i64: 1, 128>}, {transform_indices = @transform_3, window_bounds = array<i64: 128, 128>}]} {
    %c0_i32 = arith.constant 0 : i32
    %0 = arith.cmpi eq, %arg2, %c0_i32 : i32
    %1 = arith.extui %0 : i1 to i32
    %c0_i32_0 = arith.constant 0 : i32
    %2 = arith.cmpi ne, %1, %c0_i32_0 : i32
    scf.if %2 {
      %c0_10 = arith.constant 0 : index
      %c0_11 = arith.constant 0 : index
      %12 = vector.load %arg5[%c0_10, %c0_11] : memref<1x128xf32, #tpu.memory_space<vmem>>, vector<1x128xf32>
      %13 = vector.shape_cast %12 : vector<1x128xf32> to vector<1x128xf32>
      %14 = vector.broadcast %13 : vector<1x128xf32> to vector<128x128xf32>
      %c0_12 = arith.constant 0 : index
      %c0_13 = arith.constant 0 : index
      %15 = vector.load %arg7[%c0_12, %c0_13] : memref<128x128xf32, #tpu.memory_space<vmem>>, vector<128x128xf32>
      tpu.vector_store %arg7[%c0_12, %c0_13], %14 {strides = array<i32>} : memref<128x128xf32, #tpu.memory_space<vmem>>, vector<128x128xf32>,
    } else {
    }
    %c0 = arith.constant 0 : index
    %c0_1 = arith.constant 0 : index
    %3 = vector.load %arg7[%c0, %c0_1] : memref<128x128xf32, #tpu.memory_space<vmem>>, vector<128x128xf32>
    %c0_2 = arith.constant 0 : index
    %c0_3 = arith.constant 0 : index
    %4 = vector.load %arg3[%c0_2, %c0_3] : memref<128x128xbf16, #tpu.memory_space<vmem>>, vector<128x128xbf16>
    %c0_4 = arith.constant 0 : index
    %c0_5 = arith.constant 0 : index
    %5 = vector.load %arg4[%c0_4, %c0_5] : memref<128x128xbf16, #tpu.memory_space<vmem>>, vector<128x128xbf16>
    %cst = arith.constant dense<0.000000e+00> : vector<128x128xf32>
    %6 = tpu.matmul %4, %5, %cst {dimension_numbers = #tpu.dot_dimension_numbers<[1], [0], [0], [1], [0, 0, 1, 1], [], []>} : vector<128x128xbf16>, vector<128x128xbf16>, vector<128x128xf32> -> vector<128x128xf32>
    %7 = arith.addf %3, %6 : vector<128x128xf32>
    %c0_6 = arith.constant 0 : index
    %c0_7 = arith.constant 0 : index
    %8 = vector.load %arg7[%c0_6, %c0_7] : memref<128x128xf32, #tpu.memory_space<vmem>>, vector<128x128xf32>
    tpu.vector_store %arg7[%c0_6, %c0_7], %7 {strides = array<i32>} : memref<128x128xf32, #tpu.memory_space<vmem>>, vector<128x128xf32>,
    %c0_i32_8 = arith.constant 0 : i32
    %9 = arith.cmpi eq, %arg2, %c0_i32_8 : i32
    %10 = arith.extui %9 : i1 to i32
    %c0_i32_9 = arith.constant 0 : i32
    %11 = arith.cmpi ne, %10, %c0_i32_9 : i32
    scf.if %11 {
      %c0_10 = arith.constant 0 : index
      %c0_11 = arith.constant 0 : index
      %12 = vector.load %arg7[%c0_10, %c0_11] : memref<128x128xf32, #tpu.memory_space<vmem>>, vector<128x128xf32>
      %cst_12 = arith.constant 0.000000e+00 : f32
      %13 = vector.broadcast %cst_12 : f32 to vector<128x128xf32>
      %14 = arith.maximumf %12, %13 : vector<128x128xf32>
      %15 = arith.truncf %14 : vector<128x128xf32> to vector<128x128xbf16>
      %c0_13 = arith.constant 0 : index
      %c0_14 = arith.constant 0 : index
      %16 = vector.load %arg6[%c0_13, %c0_14] : memref<128x128xbf16, #tpu.memory_space<vmem>>, vector<128x128xbf16>
      tpu.vector_store %arg6[%c0_13, %c0_14], %15 {strides = array<i32>} : memref<128x128xbf16, #tpu.memory_space<vmem>>, vector<128x128xbf16>,
    } else {
    }
    return
  }
  func.func @transform_0(%arg0: i32, %arg1: i32, %arg2: i32) -> (i32, i32) {
    %c0_i32 = arith.constant 0 : i32
    return %arg0, %arg2 : i32, i32
  }
  func.func @transform_1(%arg0: i32, %arg1: i32, %arg2: i32) -> (i32, i32) {
    %c0_i32 = arith.constant 0 : i32
    return %arg2, %arg1 : i32, i32
  }
  func.func @transform_2(%arg0: i32, %arg1: i32, %arg2: i32) -> (i32, i32) {
    %c0_i32 = arith.constant 0 : i32
    %c0_i32_0 = arith.constant 0 : i32
    return %c0_i32, %arg1 : i32, i32
  }
  func.func @transform_3(%arg0: i32, %arg1: i32, %arg2: i32) -> (i32, i32) {
    %c0_i32 = arith.constant 0 : i32
    return %arg0, %arg1 : i32, i32
  }
}

module attributes {stable_mosaic.version = 11 : i64} {
  func.func @_mm_bias_ds_kernel(%arg0: i32, %arg1: i32, %arg2: i32, %arg3: memref<128x128xbf16, #tpu.memory_space<vmem>>, %arg4: memref<128x128xbf16, #tpu.memory_space<vmem>>, %arg5: memref<1x128xf32, #tpu.memory_space<vmem>>, %arg6: memref<128x128xbf16, #tpu.memory_space<vmem>>, %arg7: memref<128x128xbf16, #tpu.memory_space<vmem>>, %arg8: memref<128x128xf32, #tpu.memory_space<vmem>>, %arg9: memref<128x128xf32, #tpu.memory_space<vmem>>) attributes {dimension_semantics = [#tpu.dimension_semantics<parallel>, #tpu.dimension_semantics<parallel>, #tpu.dimension_semantics<arbitrary>], iteration_bounds = array<i64: 1, 1, 1>, scalar_prefetch = 0 : i64, scratch_operands = 1 : i64, tpu.core_type = #tpu.core_type<tc>, window_params = [{transform_indices = @transform_0, window_bounds = array<i64: 128, 128>}, {transform_indices = @transform_1, window_bounds = array<i64: 128, 128>}, {transform_indices = @transform_2, window_bounds = array<i64: 1, 128>}, {transform_indices = @transform_3, window_bounds = array<i64: 128, 128>}, {transform_indices = @transform_4, window_bounds = array<i64: 128, 128>}, {transform_indices = @transform_5, window_bounds = array<i64: 128, 128>}]} {
    %c0_i32 = arith.constant 0 : i32
    %0 = arith.cmpi eq, %arg2, %c0_i32 : i32
    %1 = arith.extui %0 : i1 to i32
    %c0_i32_0 = arith.constant 0 : i32
    %2 = arith.cmpi ne, %1, %c0_i32_0 : i32
    scf.if %2 {
      %c0_10 = arith.constant 0 : index
      %c0_11 = arith.constant 0 : index
      %12 = vector.load %arg5[%c0_10, %c0_11] : memref<1x128xf32, #tpu.memory_space<vmem>>, vector<1x128xf32>
      %13 = vector.shape_cast %12 : vector<1x128xf32> to vector<1x128xf32>
      %14 = vector.broadcast %13 : vector<1x128xf32> to vector<128x128xf32>
      %c0_12 = arith.constant 0 : index
      %c0_13 = arith.constant 0 : index
      %15 = vector.load %arg6[%c0_12, %c0_13] : memref<128x128xbf16, #tpu.memory_space<vmem>>, vector<128x128xbf16>
      %c0_14 = arith.constant 0 : index
      %c0_15 = arith.constant 0 : index
      %16 = vector.load %arg7[%c0_14, %c0_15] : memref<128x128xbf16, #tpu.memory_space<vmem>>, vector<128x128xbf16>
      %cst_16 = arith.constant dense<0.000000e+00> : vector<128x128xf32>
      %17 = tpu.matmul %15, %16, %cst_16 {dimension_numbers = #tpu.dot_dimension_numbers<[1], [0], [0], [1], [0, 0, 1, 1], [], []>} : vector<128x128xbf16>, vector<128x128xbf16>, vector<128x128xf32> -> vector<128x128xf32>
      %18 = arith.addf %14, %17 : vector<128x128xf32>
      %c0_17 = arith.constant 0 : index
      %c0_18 = arith.constant 0 : index
      %19 = vector.load %arg9[%c0_17, %c0_18] : memref<128x128xf32, #tpu.memory_space<vmem>>, vector<128x128xf32>
      tpu.vector_store %arg9[%c0_17, %c0_18], %18 {strides = array<i32>} : memref<128x128xf32, #tpu.memory_space<vmem>>, vector<128x128xf32>,
    } else {
    }
    %c0 = arith.constant 0 : index
    %c0_1 = arith.constant 0 : index
    %3 = vector.load %arg9[%c0, %c0_1] : memref<128x128xf32, #tpu.memory_space<vmem>>, vector<128x128xf32>
    %c0_2 = arith.constant 0 : index
    %c0_3 = arith.constant 0 : index
    %4 = vector.load %arg3[%c0_2, %c0_3] : memref<128x128xbf16, #tpu.memory_space<vmem>>, vector<128x128xbf16>
    %c0_4 = arith.constant 0 : index
    %c0_5 = arith.constant 0 : index
    %5 = vector.load %arg4[%c0_4, %c0_5] : memref<128x128xbf16, #tpu.memory_space<vmem>>, vector<128x128xbf16>
    %cst = arith.constant dense<0.000000e+00> : vector<128x128xf32>
    %6 = tpu.matmul %4, %5, %cst {dimension_numbers = #tpu.dot_dimension_numbers<[1], [0], [0], [1], [0, 0, 1, 1], [], []>} : vector<128x128xbf16>, vector<128x128xbf16>, vector<128x128xf32> -> vector<128x128xf32>
    %7 = arith.addf %3, %6 : vector<128x128xf32>
    %c0_6 = arith.constant 0 : index
    %c0_7 = arith.constant 0 : index
    %8 = vector.load %arg9[%c0_6, %c0_7] : memref<128x128xf32, #tpu.memory_space<vmem>>, vector<128x128xf32>
    tpu.vector_store %arg9[%c0_6, %c0_7], %7 {strides = array<i32>} : memref<128x128xf32, #tpu.memory_space<vmem>>, vector<128x128xf32>,
    %c0_i32_8 = arith.constant 0 : i32
    %9 = arith.cmpi eq, %arg2, %c0_i32_8 : i32
    %10 = arith.extui %9 : i1 to i32
    %c0_i32_9 = arith.constant 0 : i32
    %11 = arith.cmpi ne, %10, %c0_i32_9 : i32
    scf.if %11 {
      %c0_10 = arith.constant 0 : index
      %c0_11 = arith.constant 0 : index
      %12 = vector.load %arg9[%c0_10, %c0_11] : memref<128x128xf32, #tpu.memory_space<vmem>>, vector<128x128xf32>
      %cst_12 = arith.constant 0.000000e+00 : f32
      %13 = vector.broadcast %cst_12 : f32 to vector<128x128xf32>
      %14 = arith.maximumf %12, %13 : vector<128x128xf32>
      %c0_13 = arith.constant 0 : index
      %c0_14 = arith.constant 0 : index
      %15 = vector.load %arg8[%c0_13, %c0_14] : memref<128x128xf32, #tpu.memory_space<vmem>>, vector<128x128xf32>
      tpu.vector_store %arg8[%c0_13, %c0_14], %14 {strides = array<i32>} : memref<128x128xf32, #tpu.memory_space<vmem>>, vector<128x128xf32>,
    } else {
    }
    return
  }
  func.func @transform_0(%arg0: i32, %arg1: i32, %arg2: i32) -> (i32, i32) {
    %c0_i32 = arith.constant 0 : i32
    return %arg0, %arg2 : i32, i32
  }
  func.func @transform_1(%arg0: i32, %arg1: i32, %arg2: i32) -> (i32, i32) {
    %c0_i32 = arith.constant 0 : i32
    return %arg2, %arg1 : i32, i32
  }
  func.func @transform_2(%arg0: i32, %arg1: i32, %arg2: i32) -> (i32, i32) {
    %c0_i32 = arith.constant 0 : i32
    %c0_i32_0 = arith.constant 0 : i32
    return %c0_i32, %arg1 : i32, i32
  }
  func.func @transform_3(%arg0: i32, %arg1: i32, %arg2: i32) -> (i32, i32) {
    %c0_i32 = arith.constant 0 : i32
    %c0_i32_0 = arith.constant 0 : i32
    return %arg0, %c0_i32 : i32, i32
  }
  func.func @transform_4(%arg0: i32, %arg1: i32, %arg2: i32) -> (i32, i32) {
    %c0_i32 = arith.constant 0 : i32
    %c0_i32_0 = arith.constant 0 : i32
    return %c0_i32, %arg1 : i32, i32
  }
  func.func @transform_5(%arg0: i32, %arg1: i32, %arg2: i32) -> (i32, i32) {
    %c0_i32 = arith.constant 0 : i32
    return %arg0, %arg1 : i32, i32
  }
}

</mosaic_0001>

<llo_original>
// kernel: basic_block_forward.2
$region0: #{basic_block_forward.2}
  #allocation0 [shape = 'u32[]', space=smem, size = 0x4, offset = 0x4, fixed_abs, tag = 'smem constant byte address 0x4 - core index']
  #allocation1 [shape = 'u32[144,128]{1,0:T(1,128)}', space=vmem, size = 0x12000, scoped, tag = 'internal scratch']
  #allocation2 [shape = 'f32[128,128]{1,0:T(8,128)}', space=vmem, size = 0x10000, scoped, tag = 'scratch operand']
  %s0 = inlined_call_operand.vmem [shape: bf16[128,128], index: 0, kind: input, shape index: {}]
  %s1 = inlined_call_operand.vmem [shape: bf16[128,128], index: 1, kind: input, shape index: {}]
  %s2 = inlined_call_operand.vmem [shape: f32[1,128], index: 2, kind: input, shape index: {}]
  %s3 = inlined_call_operand.vmem [shape: bf16[128,128], index: 3, kind: output, shape index: {}]
  %s4 = sld [smem:[#allocation0]]
  $region30: #{basic_block_forward.2} parent=0
    _
  %s6 = ssub.s32 1, %s4
  %s7 = scalar_select 0, %s6, %s4
  // Predicated region
  $region2: #{basic_block_forward.2} parent=0 // pred_check
    _
  $region3: #{basic_block_forward.2} parent=0 // pred_check_branch
    %9 = sbr.rel (0) target = $region5
  $region4: #{basic_block_forward.2} parent=0 // pred_region
    _
  $region5: #{basic_block_forward.2} parent=0 // pred_fallthru
    _
  // Predicated region
  $region6: #{basic_block_forward.2} parent=0 // pred_check
    _
  $region7: #{basic_block_forward.2} parent=0 // pred_check_branch
    %11 = sbr.rel (0) target = $region9
  $region8: #{basic_block_forward.2} parent=0 // pred_region
    _
  $region9: #{basic_block_forward.2} parent=0 // pred_fallthru
    _
  // Predicated region
  $region10: #{basic_block_forward.2} parent=0 // pred_check
    _
  $region11: #{basic_block_forward.2} parent=0 // pred_check_branch
    %13 = sbr.rel (0) target = $region13
  $region12: #{basic_block_forward.2} parent=0 // pred_region
    _
  $region13: #{basic_block_forward.2} parent=0 // pred_fallthru
    _
  %p15 = scmp.eq.s32.totalorder 0, 0
  // Predicated region
  $region14: #{basic_block_forward.2} parent=0 // pred_check
    %p16 = pneg %p15
  $region15: #{basic_block_forward.2} parent=0 // pred_check_branch
    %18 = sbr.rel (%p16) target = $region17
  $region16: #{basic_block_forward.2} parent=0 // pred_region
    %v19 = vld [vmem:[%s2] sm:$0x1]
    %v21 = vlaneseq
    %v22 = vshrl.u32 %v21, 7
    %v23 = vsub.s32 0, %v22
    %v24 = vrot.slane %v19, %v23
    %26 = vst [vmem:[#allocation2] sm:$0xff] %v24
    %27 = vst [vmem:[#allocation2 + $0x8] sm:$0xff] %v24
    %28 = vst [vmem:[#allocation2 + $0x10] sm:$0xff] %v24
    %29 = vst [vmem:[#allocation2 + $0x18] sm:$0xff] %v24
    %30 = vst [vmem:[#allocation2 + $0x20] sm:$0xff] %v24
    %31 = vst [vmem:[#allocation2 + $0x28] sm:$0xff] %v24
    %32 = vst [vmem:[#allocation2 + $0x30] sm:$0xff] %v24
    %33 = vst [vmem:[#allocation2 + $0x38] sm:$0xff] %v24
    %34 = vst [vmem:[#allocation2 + $0x40] sm:$0xff] %v24
    %35 = vst [vmem:[#allocation2 + $0x48] sm:$0xff] %v24
    %36 = vst [vmem:[#allocation2 + $0x50] sm:$0xff] %v24
    %37 = vst [vmem:[#allocation2 + $0x58] sm:$0xff] %v24
    %38 = vst [vmem:[#allocation2 + $0x60] sm:$0xff] %v24
    %39 = vst [vmem:[#allocation2 + $0x68] sm:$0xff] %v24
    %40 = vst [vmem:[#allocation2 + $0x70] sm:$0xff] %v24
    %41 = vst [vmem:[#allocation2 + $0x78] sm:$0xff] %v24
  $region17: #{basic_block_forward.2} parent=0 // pred_fallthru
    _
  %v42 = vld [vmem:[#allocation2] sm:$0xff]
  %v43 = vld [vmem:[#allocation2 + $0x8] sm:$0xff]
  %v44 = vld [vmem:[#allocation2 + $0x10] sm:$0xff]
  %v45 = vld [vmem:[#allocation2 + $0x18] sm:$0xff]
  %v46 = vld [vmem:[#allocation2 + $0x20] sm:$0xff]
  %v47 = vld [vmem:[#allocation2 + $0x28] sm:$0xff]
  %v48 = vld [vmem:[#allocation2 + $0x30] sm:$0xff]
  %v49 = vld [vmem:[#allocation2 + $0x38] sm:$0xff]
  %v50 = vld [vmem:[#allocation2 + $0x40] sm:$0xff]
  %v51 = vld [vmem:[#allocation2 + $0x48] sm:$0xff]
  %v52 = vld [vmem:[#allocation2 + $0x50] sm:$0xff]
  %v53 = vld [vmem:[#allocation2 + $0x58] sm:$0xff]
  %v54 = vld [vmem:[#allocation2 + $0x60] sm:$0xff]
  %v55 = vld [vmem:[#allocation2 + $0x68] sm:$0xff]
  %v56 = vld [vmem:[#allocation2 + $0x70] sm:$0xff]
  %v57 = vld [vmem:[#allocation2 + $0x78] sm:$0xff]
  %v58 = vld [vmem:[%s0] sm:$0xf]
  %v59 = vld [vmem:[%s0 + $0x4] sm:$0xf]
  %v60 = vld [vmem:[%s0 + $0x8] sm:$0xf]
  %v61 = vld [vmem:[%s0 + $0xc] sm:$0xf]
  %v62 = vld [vmem:[%s0 + $0x10] sm:$0xf]
  %v63 = vld [vmem:[%s0 + $0x14] sm:$0xf]
  %v64 = vld [vmem:[%s0 + $0x18] sm:$0xf]
  %v65 = vld [vmem:[%s0 + $0x1c] sm:$0xf]
  %v66 = vld [vmem:[%s0 + $0x20] sm:$0xf]
  %v67 = vld [vmem:[%s0 + $0x24] sm:$0xf]
  %v68 = vld [vmem:[%s0 + $0x28] sm:$0xf]
  %v69 = vld [vmem:[%s0 + $0x2c] sm:$0xf]
  %v70 = vld [vmem:[%s0 + $0x30] sm:$0xf]
  %v71 = vld [vmem:[%s0 + $0x34] sm:$0xf]
  %v72 = vld [vmem:[%s0 + $0x38] sm:$0xf]
  %v73 = vld [vmem:[%s0 + $0x3c] sm:$0xf]
  %v74 = vld [vmem:[%s1] sm:$0xf]
  %v75 = vld [vmem:[%s1 + $0x4] sm:$0xf]
  %v76 = vld [vmem:[%s1 + $0x8] sm:$0xf]
  %v77 = vld [vmem:[%s1 + $0xc] sm:$0xf]
  %v78 = vld [vmem:[%s1 + $0x10] sm:$0xf]
  %v79 = vld [vmem:[%s1 + $0x14] sm:$0xf]
  %v80 = vld [vmem:[%s1 + $0x18] sm:$0xf]
  %v81 = vld [vmem:[%s1 + $0x1c] sm:$0xf]
  %v82 = vld [vmem:[%s1 + $0x20] sm:$0xf]
  %v83 = vld [vmem:[%s1 + $0x24] sm:$0xf]
  %v84 = vld [vmem:[%s1 + $0x28] sm:$0xf]
  %v85 = vld [vmem:[%s1 + $0x2c] sm:$0xf]
  %v86 = vld [vmem:[%s1 + $0x30] sm:$0xf]
  %v87 = vld [vmem:[%s1 + $0x34] sm:$0xf]
  %v88 = vld [vmem:[%s1 + $0x38] sm:$0xf]
  %v89 = vld [vmem:[%s1 + $0x3c] sm:$0xf]
  %v106 = vunpack.c.l.b16 %v58
  %v107 = vunpack.c.l.b16 %v59
  %v108 = vunpack.c.l.b16 %v60
  %v109 = vunpack.c.l.b16 %v61
  %v110 = vunpack.c.l.b16 %v62
  %v111 = vunpack.c.l.b16 %v63
  %v112 = vunpack.c.l.b16 %v64
  %v113 = vunpack.c.l.b16 %v65
  %v114 = vunpack.c.l.b16 %v66
  %v115 = vunpack.c.l.b16 %v67
  %v116 = vunpack.c.l.b16 %v68
  %v117 = vunpack.c.l.b16 %v69
  %v118 = vunpack.c.l.b16 %v70
  %v119 = vunpack.c.l.b16 %v71
  %v120 = vunpack.c.l.b16 %v72
  %v121 = vunpack.c.l.b16 %v73
  %v122 = vpack.c.b16 %v107, %v106
  %v123 = vpack.c.b16 %v109, %v108
  %v124 = vpack.c.b16 %v111, %v110
  %v125 = vpack.c.b16 %v113, %v112
  %v126 = vpack.c.b16 %v115, %v114
  %v127 = vpack.c.b16 %v117, %v116
  %v128 = vpack.c.b16 %v119, %v118
  %v129 = vpack.c.b16 %v121, %v120
  %v154 = vunpack.c.l.b16 %v74
  %v155 = vunpack.c.l.b16 %v75
  %v156 = vunpack.c.l.b16 %v76
  %v157 = vunpack.c.l.b16 %v77
  %v158 = vunpack.c.l.b16 %v78
  %v159 = vunpack.c.l.b16 %v79
  %v160 = vunpack.c.l.b16 %v80
  %v161 = vunpack.c.l.b16 %v81
  %v162 = vunpack.c.l.b16 %v82
  %v163 = vunpack.c.l.b16 %v83
  %v164 = vunpack.c.l.b16 %v84
  %v165 = vunpack.c.l.b16 %v85
  %v166 = vunpack.c.l.b16 %v86
  %v167 = vunpack.c.l.b16 %v87
  %v168 = vunpack.c.l.b16 %v88
  %v169 = vunpack.c.l.b16 %v89
  %v170 = vpack.c.b16 %v155, %v154
  %v171 = vpack.c.b16 %v157, %v156
  %v172 = vpack.c.b16 %v159, %v158
  %v173 = vpack.c.b16 %v161, %v160
  %v174 = vpack.c.b16 %v163, %v162
  %v175 = vpack.c.b16 %v165, %v164
  %v176 = vpack.c.b16 %v167, %v166
  %v177 = vpack.c.b16 %v169, %v168
  %186 = vmatprep.subr.bf16.mxu0 0
  %187 = vmatpush1.bf16.msra.mxu0 %v177
  %188 = vmatprep.subr.bf16.mxu0 0
  %189 = vmatpush1.bf16.msra.mxu0 %v176
  %190 = vmatprep.subr.bf16.mxu0 0
  %191 = vmatpush1.bf16.msra.mxu0 %v175
  %192 = vmatprep.subr.bf16.mxu0 0
  %193 = vmatpush1.bf16.msra.mxu0 %v174
  %194 = vmatprep.subr.bf16.mxu0 0
  %195 = vmatpush1.bf16.msra.mxu0 %v173
  %196 = vmatprep.subr.bf16.mxu0 0
  %197 = vmatpush1.bf16.msra.mxu0 %v172
  %198 = vmatprep.subr.bf16.mxu0 0
  %199 = vmatpush1.bf16.msra.mxu0 %v171
  %200 = vmatprep.subr.bf16.mxu0 0
  %201 = vmatpush1.bf16.msra.mxu0 %v170
  %202 = vmatprep.subr.bf16.mxu0 0
  %203 = vmatpush2.bf16.msra.mxu0 0
  %204 = vmatprep.subr.bf16.mxu0 0
  %205 = vmatpush2.bf16.msra.mxu0 0
  %206 = vmatprep.subr.bf16.mxu0 0
  %207 = vmatpush2.bf16.msra.mxu0 0
  %208 = vmatprep.subr.bf16.mxu0 0
  %209 = vmatpush2.bf16.msra.mxu0 0
  %210 = vmatprep.subr.bf16.mxu0 0
  %211 = vmatpush2.bf16.msra.mxu0 0
  %212 = vmatprep.subr.bf16.mxu0 0
  %213 = vmatpush2.bf16.msra.mxu0 0
  %214 = vmatprep.subr.bf16.mxu0 0
  %215 = vmatpush2.bf16.msra.mxu0 0
  %216 = vmatprep.subr.bf16.mxu0 0
  %217 = vmatpush2.bf16.msra.mxu0 0
  %218 = vmatprep.mubr.bf16.mxu0 0
  %219 = vmatmul.mubr.bf16.gmra.mxu0 %v122
  %v220 = vpop.f32.mrf.mxu0
  %v221 = vadd.f32 0.0, %v220
  %v222 = vpop.f32.mrf.mxu0
  %v223 = vpop.f32.mrf.mxu0
  %v224 = vadd.f32 0.0, %v223
  %v225 = vpop.f32.mrf.mxu0
  %226 = vmatprep.mubr.bf16.mxu0 0
  %227 = vmatmul.mubr.bf16.gmra.mxu0 %v123
  %v228 = vpop.f32.mrf.mxu0
  %v229 = vadd.f32 0.0, %v228
  %v230 = vpop.f32.mrf.mxu0
  %v231 = vpop.f32.mrf.mxu0
  %v232 = vadd.f32 0.0, %v231
  %v233 = vpop.f32.mrf.mxu0
  %234 = vmatprep.mubr.bf16.mxu0 0
  %235 = vmatmul.mubr.bf16.gmra.mxu0 %v124
  %v236 = vpop.f32.mrf.mxu0
  %v237 = vadd.f32 0.0, %v236
  %v238 = vpop.f32.mrf.mxu0
  %v239 = vpop.f32.mrf.mxu0
  %v240 = vadd.f32 0.0, %v239
  %v241 = vpop.f32.mrf.mxu0
  %242 = vmatprep.mubr.bf16.mxu0 0
  %243 = vmatmul.mubr.bf16.gmra.mxu0 %v125
  %v244 = vpop.f32.mrf.mxu0
  %v245 = vadd.f32 0.0, %v244
  %v246 = vpop.f32.mrf.mxu0
  %v247 = vpop.f32.mrf.mxu0
  %v248 = vadd.f32 0.0, %v247
  %v249 = vpop.f32.mrf.mxu0
  %250 = vmatprep.mubr.bf16.mxu0 0
  %251 = vmatmul.mubr.bf16.gmra.mxu0 %v126
  %v252 = vpop.f32.mrf.mxu0
  %v253 = vadd.f32 0.0, %v252
  %v254 = vpop.f32.mrf.mxu0
  %v255 = vpop.f32.mrf.mxu0
  %v256 = vadd.f32 0.0, %v255
  %v257 = vpop.f32.mrf.mxu0
  %258 = vmatprep.mubr.bf16.mxu0 0
  %259 = vmatmul.mubr.bf16.gmra.mxu0 %v127
  %v260 = vpop.f32.mrf.mxu0
  %v261 = vadd.f32 0.0, %v260
  %v262 = vpop.f32.mrf.mxu0
  %v263 = vpop.f32.mrf.mxu0
  %v264 = vadd.f32 0.0, %v263
  %v265 = vpop.f32.mrf.mxu0
  %266 = vmatprep.mubr.bf16.mxu0 0
  %267 = vmatmul.mubr.bf16.gmra.mxu0 %v128
  %v268 = vpop.f32.mrf.mxu0
  %v269 = vadd.f32 0.0, %v268
  %v270 = vpop.f32.mrf.mxu0
  %v271 = vpop.f32.mrf.mxu0
  %v272 = vadd.f32 0.0, %v271
  %v273 = vpop.f32.mrf.mxu0
  %274 = vmatprep.mubr.bf16.mxu0 0
  %275 = vmatmul.mubr.bf16.gmra.mxu0 %v129
  %v276 = vpop.f32.mrf.mxu0
  %v277 = vadd.f32 0.0, %v276
  %v278 = vpop.f32.mrf.mxu0
  %v279 = vpop.f32.mrf.mxu0
  %v280 = vadd.f32 0.0, %v279
  %v281 = vpop.f32.mrf.mxu0
  %282 = vdwg.mxu0
  %v283 = vadd.f32 %v42, %v221
  %v284 = vadd.f32 %v43, %v224
  %v285 = vadd.f32 %v44, %v229
  %v286 = vadd.f32 %v45, %v232
  %v287 = vadd.f32 %v46, %v237
  %v288 = vadd.f32 %v47, %v240
  %v289 = vadd.f32 %v48, %v245
  %v290 = vadd.f32 %v49, %v248
  %v291 = vadd.f32 %v50, %v253
  %v292 = vadd.f32 %v51, %v256
  %v293 = vadd.f32 %v52, %v261
  %v294 = vadd.f32 %v53, %v264
  %v295 = vadd.f32 %v54, %v269
  %v296 = vadd.f32 %v55, %v272
  %v297 = vadd.f32 %v56, %v277
  %v298 = vadd.f32 %v57, %v280
  %299 = vst [vmem:[#allocation2] sm:$0xff] %v283
  %300 = vst [vmem:[#allocation2 + $0x8] sm:$0xff] %v284
  %301 = vst [vmem:[#allocation2 + $0x10] sm:$0xff] %v285
  %302 = vst [vmem:[#allocation2 + $0x18] sm:$0xff] %v286
  %303 = vst [vmem:[#allocation2 + $0x20] sm:$0xff] %v287
  %304 = vst [vmem:[#allocation2 + $0x28] sm:$0xff] %v288
  %305 = vst [vmem:[#allocation2 + $0x30] sm:$0xff] %v289
  %306 = vst [vmem:[#allocation2 + $0x38] sm:$0xff] %v290
  %307 = vst [vmem:[#allocation2 + $0x40] sm:$0xff] %v291
  %308 = vst [vmem:[#allocation2 + $0x48] sm:$0xff] %v292
  %309 = vst [vmem:[#allocation2 + $0x50] sm:$0xff] %v293
  %310 = vst [vmem:[#allocation2 + $0x58] sm:$0xff] %v294
  %311 = vst [vmem:[#allocation2 + $0x60] sm:$0xff] %v295
  %312 = vst [vmem:[#allocation2 + $0x68] sm:$0xff] %v296
  %313 = vst [vmem:[#allocation2 + $0x70] sm:$0xff] %v297
  %314 = vst [vmem:[#allocation2 + $0x78] sm:$0xff] %v298
  // Predicated region
  $region18: #{basic_block_forward.2} parent=0 // pred_check
    %p315 = pneg %p15
  $region19: #{basic_block_forward.2} parent=0 // pred_check_branch
    %317 = sbr.rel (%p315) target = $region21
  $region20: #{basic_block_forward.2} parent=0 // pred_region
    %v318 = vld [vmem:[#allocation2] sm:$0xff]
    %v319 = vld [vmem:[#allocation2 + $0x8] sm:$0xff]
    %v320 = vld [vmem:[#allocation2 + $0x10] sm:$0xff]
    %v321 = vld [vmem:[#allocation2 + $0x18] sm:$0xff]
    %v322 = vld [vmem:[#allocation2 + $0x20] sm:$0xff]
    %v323 = vld [vmem:[#allocation2 + $0x28] sm:$0xff]
    %v324 = vld [vmem:[#allocation2 + $0x30] sm:$0xff]
    %v325 = vld [vmem:[#allocation2 + $0x38] sm:$0xff]
    %v326 = vld [vmem:[#allocation2 + $0x40] sm:$0xff]
    %v327 = vld [vmem:[#allocation2 + $0x48] sm:$0xff]
    %v328 = vld [vmem:[#allocation2 + $0x50] sm:$0xff]
    %v329 = vld [vmem:[#allocation2 + $0x58] sm:$0xff]
    %v330 = vld [vmem:[#allocation2 + $0x60] sm:$0xff]
    %v331 = vld [vmem:[#allocation2 + $0x68] sm:$0xff]
    %v332 = vld [vmem:[#allocation2 + $0x70] sm:$0xff]
    %v333 = vld [vmem:[#allocation2 + $0x78] sm:$0xff]
    %v334 = vmax.f32 %v318, 0.0
    %v335 = vmax.f32 %v319, 0.0
    %v336 = vmax.f32 %v320, 0.0
    %v337 = vmax.f32 %v321, 0.0
    %v338 = vmax.f32 %v322, 0.0
    %v339 = vmax.f32 %v323, 0.0
    %v340 = vmax.f32 %v324, 0.0
    %v341 = vmax.f32 %v325, 0.0
    %v342 = vmax.f32 %v326, 0.0
    %v343 = vmax.f32 %v327, 0.0
    %v344 = vmax.f32 %v328, 0.0
    %v345 = vmax.f32 %v329, 0.0
    %v346 = vmax.f32 %v330, 0.0
    %v347 = vmax.f32 %v331, 0.0
    %v348 = vmax.f32 %v332, 0.0
    %v349 = vmax.f32 %v333, 0.0
    %v350 = vpack.c.bf16 %v335, %v334
    %v351 = vpack.c.bf16 %v337, %v336
    %v352 = vpack.c.bf16 %v339, %v338
    %v353 = vpack.c.bf16 %v341, %v340
    %v354 = vpack.c.bf16 %v343, %v342
    %v355 = vpack.c.bf16 %v345, %v344
    %v356 = vpack.c.bf16 %v347, %v346
    %v357 = vpack.c.bf16 %v349, %v348
    %v366 = vunpack.c.l.b16 %v350
    %v367 = vunpack.c.h.b16 %v350
    %v368 = vunpack.c.l.b16 %v351
    %v369 = vunpack.c.h.b16 %v351
    %v370 = vunpack.c.l.b16 %v352
    %v371 = vunpack.c.h.b16 %v352
    %v372 = vunpack.c.l.b16 %v353
    %v373 = vunpack.c.h.b16 %v353
    %v374 = vunpack.c.l.b16 %v354
    %v375 = vunpack.c.h.b16 %v354
    %v376 = vunpack.c.l.b16 %v355
    %v377 = vunpack.c.h.b16 %v355
    %v378 = vunpack.c.l.b16 %v356
    %v379 = vunpack.c.h.b16 %v356
    %v380 = vunpack.c.l.b16 %v357
    %v381 = vunpack.c.h.b16 %v357
    %v382 = vpack.c.b16 %v366, %v366
    %v383 = vpack.c.b16 %v367, %v367
    %v384 = vpack.c.b16 %v368, %v368
    %v385 = vpack.c.b16 %v369, %v369
    %v386 = vpack.c.b16 %v370, %v370
    %v387 = vpack.c.b16 %v371, %v371
    %v388 = vpack.c.b16 %v372, %v372
    %v389 = vpack.c.b16 %v373, %v373
    %v390 = vpack.c.b16 %v374, %v374
    %v391 = vpack.c.b16 %v375, %v375
    %v392 = vpack.c.b16 %v376, %v376
    %v393 = vpack.c.b16 %v377, %v377
    %v394 = vpack.c.b16 %v378, %v378
    %v395 = vpack.c.b16 %v379, %v379
    %v396 = vpack.c.b16 %v380, %v380
    %v397 = vpack.c.b16 %v381, %v381
    %414 = vst [vmem:[%s3] sm:$0xf] %v382
    %415 = vst [vmem:[%s3 + $0x4] sm:$0xf] %v383
    %416 = vst [vmem:[%s3 + $0x8] sm:$0xf] %v384
    %417 = vst [vmem:[%s3 + $0xc] sm:$0xf] %v385
    %418 = vst [vmem:[%s3 + $0x10] sm:$0xf] %v386
    %419 = vst [vmem:[%s3 + $0x14] sm:$0xf] %v387
    %420 = vst [vmem:[%s3 + $0x18] sm:$0xf] %v388
    %421 = vst [vmem:[%s3 + $0x1c] sm:$0xf] %v389
    %422 = vst [vmem:[%s3 + $0x20] sm:$0xf] %v390
    %423 = vst [vmem:[%s3 + $0x24] sm:$0xf] %v391
    %424 = vst [vmem:[%s3 + $0x28] sm:$0xf] %v392
    %425 = vst [vmem:[%s3 + $0x2c] sm:$0xf] %v393
    %426 = vst [vmem:[%s3 + $0x30] sm:$0xf] %v394
    %427 = vst [vmem:[%s3 + $0x34] sm:$0xf] %v395
    %428 = vst [vmem:[%s3 + $0x38] sm:$0xf] %v396
    %429 = vst [vmem:[%s3 + $0x3c] sm:$0xf] %v397
  $region21: #{basic_block_forward.2} parent=0 // pred_fallthru
    _
  // Predicated region
  $region22: #{basic_block_forward.2} parent=0 // pred_check
    _
  $region23: #{basic_block_forward.2} parent=0 // pred_check_branch
    %431 = sbr.rel (0) target = $region25
  $region24: #{basic_block_forward.2} parent=0 // pred_region
    _
  $region25: #{basic_block_forward.2} parent=0 // pred_fallthru
    _
  // Predicated region
  $region26: #{basic_block_forward.2} parent=0 // pred_check
    _
  $region27: #{basic_block_forward.2} parent=0 // pred_check_branch
    %433 = sbr.rel (0) target = $region29
  $region28: #{basic_block_forward.2} parent=0 // pred_region
    _
  $region29: #{basic_block_forward.2} parent=0 // pred_fallthru
    _

// kernel: basic_block_forward.3
$region0: #{basic_block_forward.3}
  #allocation0 [shape = 'u32[]', space=smem, size = 0x4, offset = 0x4, fixed_abs, tag = 'smem constant byte address 0x4 - core index']
  #allocation1 [shape = 'u32[144,128]{1,0:T(1,128)}', space=vmem, size = 0x12000, scoped, tag = 'internal scratch']
  #allocation2 [shape = 'f32[128,128]{1,0:T(8,128)}', space=vmem, size = 0x10000, scoped, tag = 'scratch operand']
  %s0 = inlined_call_operand.vmem [shape: bf16[128,128], index: 0, kind: input, shape index: {}]
  %s1 = inlined_call_operand.vmem [shape: bf16[128,128], index: 1, kind: input, shape index: {}]
  %s2 = inlined_call_operand.vmem [shape: f32[1,128], index: 2, kind: input, shape index: {}]
  %s3 = inlined_call_operand.vmem [shape: bf16[128,128], index: 3, kind: input, shape index: {}]
  %s4 = inlined_call_operand.vmem [shape: bf16[128,128], index: 4, kind: input, shape index: {}]
  %s5 = inlined_call_operand.vmem [shape: f32[128,128], index: 5, kind: output, shape index: {}]
  %s6 = sld [smem:[#allocation0]]
  $region38: #{basic_block_forward.3} parent=0
    _
  %s8 = ssub.s32 1, %s6
  %s9 = scalar_select 0, %s8, %s6
  // Predicated region
  $region2: #{basic_block_forward.3} parent=0 // pred_check
    _
  $region3: #{basic_block_forward.3} parent=0 // pred_check_branch
    %11 = sbr.rel (0) target = $region5
  $region4: #{basic_block_forward.3} parent=0 // pred_region
    _
  $region5: #{basic_block_forward.3} parent=0 // pred_fallthru
    _
  // Predicated region
  $region6: #{basic_block_forward.3} parent=0 // pred_check
    _
  $region7: #{basic_block_forward.3} parent=0 // pred_check_branch
    %13 = sbr.rel (0) target = $region9
  $region8: #{basic_block_forward.3} parent=0 // pred_region
    _
  $region9: #{basic_block_forward.3} parent=0 // pred_fallthru
    _
  // Predicated region
  $region10: #{basic_block_forward.3} parent=0 // pred_check
    _
  $region11: #{basic_block_forward.3} parent=0 // pred_check_branch
    %15 = sbr.rel (0) target = $region13
  $region12: #{basic_block_forward.3} parent=0 // pred_region
    _
  $region13: #{basic_block_forward.3} parent=0 // pred_fallthru
    _
  // Predicated region
  $region14: #{basic_block_forward.3} parent=0 // pred_check
    _
  $region15: #{basic_block_forward.3} parent=0 // pred_check_branch
    %17 = sbr.rel (0) target = $region17
  $region16: #{basic_block_forward.3} parent=0 // pred_region
    _
  $region17: #{basic_block_forward.3} parent=0 // pred_fallthru
    _
  // Predicated region
  $region18: #{basic_block_forward.3} parent=0 // pred_check
    _
  $region19: #{basic_block_forward.3} parent=0 // pred_check_branch
    %19 = sbr.rel (0) target = $region21
  $region20: #{basic_block_forward.3} parent=0 // pred_region
    _
  $region21: #{basic_block_forward.3} parent=0 // pred_fallthru
    _
  %p21 = scmp.eq.s32.totalorder 0, 0
  // Predicated region
  $region22: #{basic_block_forward.3} parent=0 // pred_check
    %p22 = pneg %p21
  $region23: #{basic_block_forward.3} parent=0 // pred_check_branch
    %24 = sbr.rel (%p22) target = $region25
  $region24: #{basic_block_forward.3} parent=0 // pred_region
    %v25 = vld [vmem:[%s2] sm:$0x1]
    %v27 = vlaneseq
    %v28 = vshrl.u32 %v27, 7
    %v29 = vsub.s32 0, %v28
    %v30 = vrot.slane %v25, %v29
    %v32 = vld [vmem:[%s3] sm:$0xf]
    %v33 = vld [vmem:[%s3 + $0x4] sm:$0xf]
    %v34 = vld [vmem:[%s3 + $0x8] sm:$0xf]
    %v35 = vld [vmem:[%s3 + $0xc] sm:$0xf]
    %v36 = vld [vmem:[%s3 + $0x10] sm:$0xf]
    %v37 = vld [vmem:[%s3 + $0x14] sm:$0xf]
    %v38 = vld [vmem:[%s3 + $0x18] sm:$0xf]
    %v39 = vld [vmem:[%s3 + $0x1c] sm:$0xf]
    %v40 = vld [vmem:[%s3 + $0x20] sm:$0xf]
    %v41 = vld [vmem:[%s3 + $0x24] sm:$0xf]
    %v42 = vld [vmem:[%s3 + $0x28] sm:$0xf]
    %v43 = vld [vmem:[%s3 + $0x2c] sm:$0xf]
    %v44 = vld [vmem:[%s3 + $0x30] sm:$0xf]
    %v45 = vld [vmem:[%s3 + $0x34] sm:$0xf]
    %v46 = vld [vmem:[%s3 + $0x38] sm:$0xf]
    %v47 = vld [vmem:[%s3 + $0x3c] sm:$0xf]
    %v48 = vld [vmem:[%s4] sm:$0xf]
    %v49 = vld [vmem:[%s4 + $0x4] sm:$0xf]
    %v50 = vld [vmem:[%s4 + $0x8] sm:$0xf]
    %v51 = vld [vmem:[%s4 + $0xc] sm:$0xf]
    %v52 = vld [vmem:[%s4 + $0x10] sm:$0xf]
    %v53 = vld [vmem:[%s4 + $0x14] sm:$0xf]
    %v54 = vld [vmem:[%s4 + $0x18] sm:$0xf]
    %v55 = vld [vmem:[%s4 + $0x1c] sm:$0xf]
    %v56 = vld [vmem:[%s4 + $0x20] sm:$0xf]
    %v57 = vld [vmem:[%s4 + $0x24] sm:$0xf]
    %v58 = vld [vmem:[%s4 + $0x28] sm:$0xf]
    %v59 = vld [vmem:[%s4 + $0x2c] sm:$0xf]
    %v60 = vld [vmem:[%s4 + $0x30] sm:$0xf]
    %v61 = vld [vmem:[%s4 + $0x34] sm:$0xf]
    %v62 = vld [vmem:[%s4 + $0x38] sm:$0xf]
    %v63 = vld [vmem:[%s4 + $0x3c] sm:$0xf]
    %v80 = vunpack.c.l.b16 %v32
    %v81 = vunpack.c.l.b16 %v33
    %v82 = vunpack.c.l.b16 %v34
    %v83 = vunpack.c.l.b16 %v35
    %v84 = vunpack.c.l.b16 %v36
    %v85 = vunpack.c.l.b16 %v37
    %v86 = vunpack.c.l.b16 %v38
    %v87 = vunpack.c.l.b16 %v39
    %v88 = vunpack.c.l.b16 %v40
    %v89 = vunpack.c.l.b16 %v41
    %v90 = vunpack.c.l.b16 %v42
    %v91 = vunpack.c.l.b16 %v43
    %v92 = vunpack.c.l.b16 %v44
    %v93 = vunpack.c.l.b16 %v45
    %v94 = vunpack.c.l.b16 %v46
    %v95 = vunpack.c.l.b16 %v47
    %v96 = vpack.c.b16 %v81, %v80
    %v97 = vpack.c.b16 %v83, %v82
    %v98 = vpack.c.b16 %v85, %v84
    %v99 = vpack.c.b16 %v87, %v86
    %v100 = vpack.c.b16 %v89, %v88
    %v101 = vpack.c.b16 %v91, %v90
    %v102 = vpack.c.b16 %v93, %v92
    %v103 = vpack.c.b16 %v95, %v94
    %v128 = vunpack.c.l.b16 %v48
    %v129 = vunpack.c.l.b16 %v49
    %v130 = vunpack.c.l.b16 %v50
    %v131 = vunpack.c.l.b16 %v51
    %v132 = vunpack.c.l.b16 %v52
    %v133 = vunpack.c.l.b16 %v53
    %v134 = vunpack.c.l.b16 %v54
    %v135 = vunpack.c.l.b16 %v55
    %v136 = vunpack.c.l.b16 %v56
    %v137 = vunpack.c.l.b16 %v57
    %v138 = vunpack.c.l.b16 %v58
    %v139 = vunpack.c.l.b16 %v59
    %v140 = vunpack.c.l.b16 %v60
    %v141 = vunpack.c.l.b16 %v61
    %v142 = vunpack.c.l.b16 %v62
    %v143 = vunpack.c.l.b16 %v63
    %v144 = vpack.c.b16 %v129, %v128
    %v145 = vpack.c.b16 %v131, %v130
    %v146 = vpack.c.b16 %v133, %v132
    %v147 = vpack.c.b16 %v135, %v134
    %v148 = vpack.c.b16 %v137, %v136
    %v149 = vpack.c.b16 %v139, %v138
    %v150 = vpack.c.b16 %v141, %v140
    %v151 = vpack.c.b16 %v143, %v142
    %160 = vmatprep.subr.bf16.mxu0 0
    %161 = vmatpush1.bf16.msra.mxu0 %v151
    %162 = vmatprep.subr.bf16.mxu0 0
    %163 = vmatpush1.bf16.msra.mxu0 %v150
    %164 = vmatprep.subr.bf16.mxu0 0
    %165 = vmatpush1.bf16.msra.mxu0 %v149
    %166 = vmatprep.subr.bf16.mxu0 0
    %167 = vmatpush1.bf16.msra.mxu0 %v148
    %168 = vmatprep.subr.bf16.mxu0 0
    %169 = vmatpush1.bf16.msra.mxu0 %v147
    %170 = vmatprep.subr.bf16.mxu0 0
    %171 = vmatpush1.bf16.msra.mxu0 %v146
    %172 = vmatprep.subr.bf16.mxu0 0
    %173 = vmatpush1.bf16.msra.mxu0 %v145
    %174 = vmatprep.subr.bf16.mxu0 0
    %175 = vmatpush1.bf16.msra.mxu0 %v144
    %176 = vmatprep.subr.bf16.mxu0 0
    %177 = vmatpush2.bf16.msra.mxu0 0
    %178 = vmatprep.subr.bf16.mxu0 0
    %179 = vmatpush2.bf16.msra.mxu0 0
    %180 = vmatprep.subr.bf16.mxu0 0
    %181 = vmatpush2.bf16.msra.mxu0 0
    %182 = vmatprep.subr.bf16.mxu0 0
    %183 = vmatpush2.bf16.msra.mxu0 0
    %184 = vmatprep.subr.bf16.mxu0 0
    %185 = vmatpush2.bf16.msra.mxu0 0
    %186 = vmatprep.subr.bf16.mxu0 0
    %187 = vmatpush2.bf16.msra.mxu0 0
    %188 = vmatprep.subr.bf16.mxu0 0
    %189 = vmatpush2.bf16.msra.mxu0 0
    %190 = vmatprep.subr.bf16.mxu0 0
    %191 = vmatpush2.bf16.msra.mxu0 0
    %192 = vmatprep.mubr.bf16.mxu0 0
    %193 = vmatmul.mubr.bf16.gmra.mxu0 %v96
    %v194 = vpop.f32.mrf.mxu0
    %v195 = vadd.f32 0.0, %v194
    %v196 = vpop.f32.mrf.mxu0
    %v197 = vpop.f32.mrf.mxu0
    %v198 = vadd.f32 0.0, %v197
    %v199 = vpop.f32.mrf.mxu0
    %200 = vmatprep.mubr.bf16.mxu0 0
    %201 = vmatmul.mubr.bf16.gmra.mxu0 %v97
    %v202 = vpop.f32.mrf.mxu0
    %v203 = vadd.f32 0.0, %v202
    %v204 = vpop.f32.mrf.mxu0
    %v205 = vpop.f32.mrf.mxu0
    %v206 = vadd.f32 0.0, %v205
    %v207 = vpop.f32.mrf.mxu0
    %208 = vmatprep.mubr.bf16.mxu0 0
    %209 = vmatmul.mubr.bf16.gmra.mxu0 %v98
    %v210 = vpop.f32.mrf.mxu0
    %v211 = vadd.f32 0.0, %v210
    %v212 = vpop.f32.mrf.mxu0
    %v213 = vpop.f32.mrf.mxu0
    %v214 = vadd.f32 0.0, %v213
    %v215 = vpop.f32.mrf.mxu0
    %216 = vmatprep.mubr.bf16.mxu0 0
    %217 = vmatmul.mubr.bf16.gmra.mxu0 %v99
    %v218 = vpop.f32.mrf.mxu0
    %v219 = vadd.f32 0.0, %v218
    %v220 = vpop.f32.mrf.mxu0
    %v221 = vpop.f32.mrf.mxu0
    %v222 = vadd.f32 0.0, %v221
    %v223 = vpop.f32.mrf.mxu0
    %224 = vmatprep.mubr.bf16.mxu0 0
    %225 = vmatmul.mubr.bf16.gmra.mxu0 %v100
    %v226 = vpop.f32.mrf.mxu0
    %v227 = vadd.f32 0.0, %v226
    %v228 = vpop.f32.mrf.mxu0
    %v229 = vpop.f32.mrf.mxu0
    %v230 = vadd.f32 0.0, %v229
    %v231 = vpop.f32.mrf.mxu0
    %232 = vmatprep.mubr.bf16.mxu0 0
    %233 = vmatmul.mubr.bf16.gmra.mxu0 %v101
    %v234 = vpop.f32.mrf.mxu0
    %v235 = vadd.f32 0.0, %v234
    %v236 = vpop.f32.mrf.mxu0
    %v237 = vpop.f32.mrf.mxu0
    %v238 = vadd.f32 0.0, %v237
    %v239 = vpop.f32.mrf.mxu0
    %240 = vmatprep.mubr.bf16.mxu0 0
    %241 = vmatmul.mubr.bf16.gmra.mxu0 %v102
    %v242 = vpop.f32.mrf.mxu0
    %v243 = vadd.f32 0.0, %v242
    %v244 = vpop.f32.mrf.mxu0
    %v245 = vpop.f32.mrf.mxu0
    %v246 = vadd.f32 0.0, %v245
    %v247 = vpop.f32.mrf.mxu0
    %248 = vmatprep.mubr.bf16.mxu0 0
    %249 = vmatmul.mubr.bf16.gmra.mxu0 %v103
    %v250 = vpop.f32.mrf.mxu0
    %v251 = vadd.f32 0.0, %v250
    %v252 = vpop.f32.mrf.mxu0
    %v253 = vpop.f32.mrf.mxu0
    %v254 = vadd.f32 0.0, %v253
    %v255 = vpop.f32.mrf.mxu0
    %256 = vdwg.mxu0
    %v257 = vadd.f32 %v30, %v195
    %v258 = vadd.f32 %v30, %v198
    %v259 = vadd.f32 %v30, %v203
    %v260 = vadd.f32 %v30, %v206
    %v261 = vadd.f32 %v30, %v211
    %v262 = vadd.f32 %v30, %v214
    %v263 = vadd.f32 %v30, %v219
    %v264 = vadd.f32 %v30, %v222
    %v265 = vadd.f32 %v30, %v227
    %v266 = vadd.f32 %v30, %v230
    %v267 = vadd.f32 %v30, %v235
    %v268 = vadd.f32 %v30, %v238
    %v269 = vadd.f32 %v30, %v243
    %v270 = vadd.f32 %v30, %v246
    %v271 = vadd.f32 %v30, %v251
    %v272 = vadd.f32 %v30, %v254
    %273 = vst [vmem:[#allocation2] sm:$0xff] %v257
    %274 = vst [vmem:[#allocation2 + $0x8] sm:$0xff] %v258
    %275 = vst [vmem:[#allocation2 + $0x10] sm:$0xff] %v259
    %276 = vst [vmem:[#allocation2 + $0x18] sm:$0xff] %v260
    %277 = vst [vmem:[#allocation2 + $0x20] sm:$0xff] %v261
    %278 = vst [vmem:[#allocation2 + $0x28] sm:$0xff] %v262
    %279 = vst [vmem:[#allocation2 + $0x30] sm:$0xff] %v263
    %280 = vst [vmem:[#allocation2 + $0x38] sm:$0xff] %v264
    %281 = vst [vmem:[#allocation2 + $0x40] sm:$0xff] %v265
    %282 = vst [vmem:[#allocation2 + $0x48] sm:$0xff] %v266
    %283 = vst [vmem:[#allocation2 + $0x50] sm:$0xff] %v267
    %284 = vst [vmem:[#allocation2 + $0x58] sm:$0xff] %v268
    %285 = vst [vmem:[#allocation2 + $0x60] sm:$0xff] %v269
    %286 = vst [vmem:[#allocation2 + $0x68] sm:$0xff] %v270
    %287 = vst [vmem:[#allocation2 + $0x70] sm:$0xff] %v271
    %288 = vst [vmem:[#allocation2 + $0x78] sm:$0xff] %v272
  $region25: #{basic_block_forward.3} parent=0 // pred_fallthru
    _
  %v289 = vld [vmem:[#allocation2] sm:$0xff]
  %v290 = vld [vmem:[#allocation2 + $0x8] sm:$0xff]
  %v291 = vld [vmem:[#allocation2 + $0x10] sm:$0xff]
  %v292 = vld [vmem:[#allocation2 + $0x18] sm:$0xff]
  %v293 = vld [vmem:[#allocation2 + $0x20] sm:$0xff]
  %v294 = vld [vmem:[#allocation2 + $0x28] sm:$0xff]
  %v295 = vld [vmem:[#allocation2 + $0x30] sm:$0xff]
  %v296 = vld [vmem:[#allocation2 + $0x38] sm:$0xff]
  %v297 = vld [vmem:[#allocation2 + $0x40] sm:$0xff]
  %v298 = vld [vmem:[#allocation2 + $0x48] sm:$0xff]
  %v299 = vld [vmem:[#allocation2 + $0x50] sm:$0xff]
  %v300 = vld [vmem:[#allocation2 + $0x58] sm:$0xff]
  %v301 = vld [vmem:[#allocation2 + $0x60] sm:$0xff]
  %v302 = vld [vmem:[#allocation2 + $0x68] sm:$0xff]
  %v303 = vld [vmem:[#allocation2 + $0x70] sm:$0xff]
  %v304 = vld [vmem:[#allocation2 + $0x78] sm:$0xff]
  %v305 = vld [vmem:[%s0] sm:$0xf]
  %v306 = vld [vmem:[%s0 + $0x4] sm:$0xf]
  %v307 = vld [vmem:[%s0 + $0x8] sm:$0xf]
  %v308 = vld [vmem:[%s0 + $0xc] sm:$0xf]
  %v309 = vld [vmem:[%s0 + $0x10] sm:$0xf]
  %v310 = vld [vmem:[%s0 + $0x14] sm:$0xf]
  %v311 = vld [vmem:[%s0 + $0x18] sm:$0xf]
  %v312 = vld [vmem:[%s0 + $0x1c] sm:$0xf]
  %v313 = vld [vmem:[%s0 + $0x20] sm:$0xf]
  %v314 = vld [vmem:[%s0 + $0x24] sm:$0xf]
  %v315 = vld [vmem:[%s0 + $0x28] sm:$0xf]
  %v316 = vld [vmem:[%s0 + $0x2c] sm:$0xf]
  %v317 = vld [vmem:[%s0 + $0x30] sm:$0xf]
  %v318 = vld [vmem:[%s0 + $0x34] sm:$0xf]
  %v319 = vld [vmem:[%s0 + $0x38] sm:$0xf]
  %v320 = vld [vmem:[%s0 + $0x3c] sm:$0xf]
  %v321 = vld [vmem:[%s1] sm:$0xf]
  %v322 = vld [vmem:[%s1 + $0x4] sm:$0xf]
  %v323 = vld [vmem:[%s1 + $0x8] sm:$0xf]
  %v324 = vld [vmem:[%s1 + $0xc] sm:$0xf]
  %v325 = vld [vmem:[%s1 + $0x10] sm:$0xf]
  %v326 = vld [vmem:[%s1 + $0x14] sm:$0xf]
  %v327 = vld [vmem:[%s1 + $0x18] sm:$0xf]
  %v328 = vld [vmem:[%s1 + $0x1c] sm:$0xf]
  %v329 = vld [vmem:[%s1 + $0x20] sm:$0xf]
  %v330 = vld [vmem:[%s1 + $0x24] sm:$0xf]
  %v331 = vld [vmem:[%s1 + $0x28] sm:$0xf]
  %v332 = vld [vmem:[%s1 + $0x2c] sm:$0xf]
  %v333 = vld [vmem:[%s1 + $0x30] sm:$0xf]
  %v334 = vld [vmem:[%s1 + $0x34] sm:$0xf]
  %v335 = vld [vmem:[%s1 + $0x38] sm:$0xf]
  %v336 = vld [vmem:[%s1 + $0x3c] sm:$0xf]
  %v353 = vunpack.c.l.b16 %v305
  %v354 = vunpack.c.l.b16 %v306
  %v355 = vunpack.c.l.b16 %v307
  %v356 = vunpack.c.l.b16 %v308
  %v357 = vunpack.c.l.b16 %v309
  %v358 = vunpack.c.l.b16 %v310
  %v359 = vunpack.c.l.b16 %v311
  %v360 = vunpack.c.l.b16 %v312
  %v361 = vunpack.c.l.b16 %v313
  %v362 = vunpack.c.l.b16 %v314
  %v363 = vunpack.c.l.b16 %v315
  %v364 = vunpack.c.l.b16 %v316
  %v365 = vunpack.c.l.b16 %v317
  %v366 = vunpack.c.l.b16 %v318
  %v367 = vunpack.c.l.b16 %v319
  %v368 = vunpack.c.l.b16 %v320
  %v369 = vpack.c.b16 %v354, %v353
  %v370 = vpack.c.b16 %v356, %v355
  %v371 = vpack.c.b16 %v358, %v357
  %v372 = vpack.c.b16 %v360, %v359
  %v373 = vpack.c.b16 %v362, %v361
  %v374 = vpack.c.b16 %v364, %v363
  %v375 = vpack.c.b16 %v366, %v365
  %v376 = vpack.c.b16 %v368, %v367
  %v401 = vunpack.c.l.b16 %v321
  %v402 = vunpack.c.l.b16 %v322
  %v403 = vunpack.c.l.b16 %v323
  %v404 = vunpack.c.l.b16 %v324
  %v405 = vunpack.c.l.b16 %v325
  %v406 = vunpack.c.l.b16 %v326
  %v407 = vunpack.c.l.b16 %v327
  %v408 = vunpack.c.l.b16 %v328
  %v409 = vunpack.c.l.b16 %v329
  %v410 = vunpack.c.l.b16 %v330
  %v411 = vunpack.c.l.b16 %v331
  %v412 = vunpack.c.l.b16 %v332
  %v413 = vunpack.c.l.b16 %v333
  %v414 = vunpack.c.l.b16 %v334
  %v415 = vunpack.c.l.b16 %v335
  %v416 = vunpack.c.l.b16 %v336
  %v417 = vpack.c.b16 %v402, %v401
  %v418 = vpack.c.b16 %v404, %v403
  %v419 = vpack.c.b16 %v406, %v405
  %v420 = vpack.c.b16 %v408, %v407
  %v421 = vpack.c.b16 %v410, %v409
  %v422 = vpack.c.b16 %v412, %v411
  %v423 = vpack.c.b16 %v414, %v413
  %v424 = vpack.c.b16 %v416, %v415
  %433 = vmatprep.subr.bf16.mxu0 0
  %434 = vmatpush1.bf16.msra.mxu0 %v424
  %435 = vmatprep.subr.bf16.mxu0 0
  %436 = vmatpush1.bf16.msra.mxu0 %v423
  %437 = vmatprep.subr.bf16.mxu0 0
  %438 = vmatpush1.bf16.msra.mxu0 %v422
  %439 = vmatprep.subr.bf16.mxu0 0
  %440 = vmatpush1.bf16.msra.mxu0 %v421
  %441 = vmatprep.subr.bf16.mxu0 0
  %442 = vmatpush1.bf16.msra.mxu0 %v420
  %443 = vmatprep.subr.bf16.mxu0 0
  %444 = vmatpush1.bf16.msra.mxu0 %v419
  %445 = vmatprep.subr.bf16.mxu0 0
  %446 = vmatpush1.bf16.msra.mxu0 %v418
  %447 = vmatprep.subr.bf16.mxu0 0
  %448 = vmatpush1.bf16.msra.mxu0 %v417
  %449 = vmatprep.subr.bf16.mxu0 0
  %450 = vmatpush2.bf16.msra.mxu0 0
  %451 = vmatprep.subr.bf16.mxu0 0
  %452 = vmatpush2.bf16.msra.mxu0 0
  %453 = vmatprep.subr.bf16.mxu0 0
  %454 = vmatpush2.bf16.msra.mxu0 0
  %455 = vmatprep.subr.bf16.mxu0 0
  %456 = vmatpush2.bf16.msra.mxu0 0
  %457 = vmatprep.subr.bf16.mxu0 0
  %458 = vmatpush2.bf16.msra.mxu0 0
  %459 = vmatprep.subr.bf16.mxu0 0
  %460 = vmatpush2.bf16.msra.mxu0 0
  %461 = vmatprep.subr.bf16.mxu0 0
  %462 = vmatpush2.bf16.msra.mxu0 0
  %463 = vmatprep.subr.bf16.mxu0 0
  %464 = vmatpush2.bf16.msra.mxu0 0
  %465 = vmatprep.mubr.bf16.mxu0 0
  %466 = vmatmul.mubr.bf16.gmra.mxu0 %v369
  %v467 = vpop.f32.mrf.mxu0
  %v468 = vadd.f32 0.0, %v467
  %v469 = vpop.f32.mrf.mxu0
  %v470 = vpop.f32.mrf.mxu0
  %v471 = vadd.f32 0.0, %v470
  %v472 = vpop.f32.mrf.mxu0
  %473 = vmatprep.mubr.bf16.mxu0 0
  %474 = vmatmul.mubr.bf16.gmra.mxu0 %v370
  %v475 = vpop.f32.mrf.mxu0
  %v476 = vadd.f32 0.0, %v475
  %v477 = vpop.f32.mrf.mxu0
  %v478 = vpop.f32.mrf.mxu0
  %v479 = vadd.f32 0.0, %v478
  %v480 = vpop.f32.mrf.mxu0
  %481 = vmatprep.mubr.bf16.mxu0 0
  %482 = vmatmul.mubr.bf16.gmra.mxu0 %v371
  %v483 = vpop.f32.mrf.mxu0
  %v484 = vadd.f32 0.0, %v483
  %v485 = vpop.f32.mrf.mxu0
  %v486 = vpop.f32.mrf.mxu0
  %v487 = vadd.f32 0.0, %v486
  %v488 = vpop.f32.mrf.mxu0
  %489 = vmatprep.mubr.bf16.mxu0 0
  %490 = vmatmul.mubr.bf16.gmra.mxu0 %v372
  %v491 = vpop.f32.mrf.mxu0
  %v492 = vadd.f32 0.0, %v491
  %v493 = vpop.f32.mrf.mxu0
  %v494 = vpop.f32.mrf.mxu0
  %v495 = vadd.f32 0.0, %v494
  %v496 = vpop.f32.mrf.mxu0
  %497 = vmatprep.mubr.bf16.mxu0 0
  %498 = vmatmul.mubr.bf16.gmra.mxu0 %v373
  %v499 = vpop.f32.mrf.mxu0
  %v500 = vadd.f32 0.0, %v499
  %v501 = vpop.f32.mrf.mxu0
  %v502 = vpop.f32.mrf.mxu0
  %v503 = vadd.f32 0.0, %v502
  %v504 = vpop.f32.mrf.mxu0
  %505 = vmatprep.mubr.bf16.mxu0 0
  %506 = vmatmul.mubr.bf16.gmra.mxu0 %v374
  %v507 = vpop.f32.mrf.mxu0
  %v508 = vadd.f32 0.0, %v507
  %v509 = vpop.f32.mrf.mxu0
  %v510 = vpop.f32.mrf.mxu0
  %v511 = vadd.f32 0.0, %v510
  %v512 = vpop.f32.mrf.mxu0
  %513 = vmatprep.mubr.bf16.mxu0 0
  %514 = vmatmul.mubr.bf16.gmra.mxu0 %v375
  %v515 = vpop.f32.mrf.mxu0
  %v516 = vadd.f32 0.0, %v515
  %v517 = vpop.f32.mrf.mxu0
  %v518 = vpop.f32.mrf.mxu0
  %v519 = vadd.f32 0.0, %v518
  %v520 = vpop.f32.mrf.mxu0
  %521 = vmatprep.mubr.bf16.mxu0 0
  %522 = vmatmul.mubr.bf16.gmra.mxu0 %v376
  %v523 = vpop.f32.mrf.mxu0
  %v524 = vadd.f32 0.0, %v523
  %v525 = vpop.f32.mrf.mxu0
  %v526 = vpop.f32.mrf.mxu0
  %v527 = vadd.f32 0.0, %v526
  %v528 = vpop.f32.mrf.mxu0
  %529 = vdwg.mxu0
  %v530 = vadd.f32 %v289, %v468
  %v531 = vadd.f32 %v290, %v471
  %v532 = vadd.f32 %v291, %v476
  %v533 = vadd.f32 %v292, %v479
  %v534 = vadd.f32 %v293, %v484
  %v535 = vadd.f32 %v294, %v487
  %v536 = vadd.f32 %v295, %v492
  %v537 = vadd.f32 %v296, %v495
  %v538 = vadd.f32 %v297, %v500
  %v539 = vadd.f32 %v298, %v503
  %v540 = vadd.f32 %v299, %v508
  %v541 = vadd.f32 %v300, %v511
  %v542 = vadd.f32 %v301, %v516
  %v543 = vadd.f32 %v302, %v519
  %v544 = vadd.f32 %v303, %v524
  %v545 = vadd.f32 %v304, %v527
  %546 = vst [vmem:[#allocation2] sm:$0xff] %v530
  %547 = vst [vmem:[#allocation2 + $0x8] sm:$0xff] %v531
  %548 = vst [vmem:[#allocation2 + $0x10] sm:$0xff] %v532
  %549 = vst [vmem:[#allocation2 + $0x18] sm:$0xff] %v533
  %550 = vst [vmem:[#allocation2 + $0x20] sm:$0xff] %v534
  %551 = vst [vmem:[#allocation2 + $0x28] sm:$0xff] %v535
  %552 = vst [vmem:[#allocation2 + $0x30] sm:$0xff] %v536
  %553 = vst [vmem:[#allocation2 + $0x38] sm:$0xff] %v537
  %554 = vst [vmem:[#allocation2 + $0x40] sm:$0xff] %v538
  %555 = vst [vmem:[#allocation2 + $0x48] sm:$0xff] %v539
  %556 = vst [vmem:[#allocation2 + $0x50] sm:$0xff] %v540
  %557 = vst [vmem:[#allocation2 + $0x58] sm:$0xff] %v541
  %558 = vst [vmem:[#allocation2 + $0x60] sm:$0xff] %v542
  %559 = vst [vmem:[#allocation2 + $0x68] sm:$0xff] %v543
  %560 = vst [vmem:[#allocation2 + $0x70] sm:$0xff] %v544
  %561 = vst [vmem:[#allocation2 + $0x78] sm:$0xff] %v545
  // Predicated region
  $region26: #{basic_block_forward.3} parent=0 // pred_check
    %p562 = pneg %p21
  $region27: #{basic_block_forward.3} parent=0 // pred_check_branch
    %564 = sbr.rel (%p562) target = $region29
  $region28: #{basic_block_forward.3} parent=0 // pred_region
    %v565 = vld [vmem:[#allocation2] sm:$0xff]
    %v566 = vld [vmem:[#allocation2 + $0x8] sm:$0xff]
    %v567 = vld [vmem:[#allocation2 + $0x10] sm:$0xff]
    %v568 = vld [vmem:[#allocation2 + $0x18] sm:$0xff]
    %v569 = vld [vmem:[#allocation2 + $0x20] sm:$0xff]
    %v570 = vld [vmem:[#allocation2 + $0x28] sm:$0xff]
    %v571 = vld [vmem:[#allocation2 + $0x30] sm:$0xff]
    %v572 = vld [vmem:[#allocation2 + $0x38] sm:$0xff]
    %v573 = vld [vmem:[#allocation2 + $0x40] sm:$0xff]
    %v574 = vld [vmem:[#allocation2 + $0x48] sm:$0xff]
    %v575 = vld [vmem:[#allocation2 + $0x50] sm:$0xff]
    %v576 = vld [vmem:[#allocation2 + $0x58] sm:$0xff]
    %v577 = vld [vmem:[#allocation2 + $0x60] sm:$0xff]
    %v578 = vld [vmem:[#allocation2 + $0x68] sm:$0xff]
    %v579 = vld [vmem:[#allocation2 + $0x70] sm:$0xff]
    %v580 = vld [vmem:[#allocation2 + $0x78] sm:$0xff]
    %v581 = vmax.f32 %v565, 0.0
    %v582 = vmax.f32 %v566, 0.0
    %v583 = vmax.f32 %v567, 0.0
    %v584 = vmax.f32 %v568, 0.0
    %v585 = vmax.f32 %v569, 0.0
    %v586 = vmax.f32 %v570, 0.0
    %v587 = vmax.f32 %v571, 0.0
    %v588 = vmax.f32 %v572, 0.0
    %v589 = vmax.f32 %v573, 0.0
    %v590 = vmax.f32 %v574, 0.0
    %v591 = vmax.f32 %v575, 0.0
    %v592 = vmax.f32 %v576, 0.0
    %v593 = vmax.f32 %v577, 0.0
    %v594 = vmax.f32 %v578, 0.0
    %v595 = vmax.f32 %v579, 0.0
    %v596 = vmax.f32 %v580, 0.0
    %597 = vst [vmem:[%s5] sm:$0xff] %v581
    %598 = vst [vmem:[%s5 + $0x8] sm:$0xff] %v582
    %599 = vst [vmem:[%s5 + $0x10] sm:$0xff] %v583
    %600 = vst [vmem:[%s5 + $0x18] sm:$0xff] %v584
    %601 = vst [vmem:[%s5 + $0x20] sm:$0xff] %v585
    %602 = vst [vmem:[%s5 + $0x28] sm:$0xff] %v586
    %603 = vst [vmem:[%s5 + $0x30] sm:$0xff] %v587
    %604 = vst [vmem:[%s5 + $0x38] sm:$0xff] %v588
    %605 = vst [vmem:[%s5 + $0x40] sm:$0xff] %v589
    %606 = vst [vmem:[%s5 + $0x48] sm:$0xff] %v590
    %607 = vst [vmem:[%s5 + $0x50] sm:$0xff] %v591
    %608 = vst [vmem:[%s5 + $0x58] sm:$0xff] %v592
    %609 = vst [vmem:[%s5 + $0x60] sm:$0xff] %v593
    %610 = vst [vmem:[%s5 + $0x68] sm:$0xff] %v594
    %611 = vst [vmem:[%s5 + $0x70] sm:$0xff] %v595
    %612 = vst [vmem:[%s5 + $0x78] sm:$0xff] %v596
  $region29: #{basic_block_forward.3} parent=0 // pred_fallthru
    _
  // Predicated region
  $region30: #{basic_block_forward.3} parent=0 // pred_check
    _
  $region31: #{basic_block_forward.3} parent=0 // pred_check_branch
    %614 = sbr.rel (0) target = $region33
  $region32: #{basic_block_forward.3} parent=0 // pred_region
    _
  $region33: #{basic_block_forward.3} parent=0 // pred_fallthru
    _
  // Predicated region
  $region34: #{basic_block_forward.3} parent=0 // pred_check
    _
  $region35: #{basic_block_forward.3} parent=0 // pred_check_branch
    %616 = sbr.rel (0) target = $region37
  $region36: #{basic_block_forward.3} parent=0 // pred_region
    _
  $region37: #{basic_block_forward.3} parent=0 // pred_fallthru
    _

</llo_original>
